<compile_context>
chip_gen: v7x
topology: tpu7x:2x2x1
jax: 0.10.0
libtpu: 0.0.40
codegen_flags: <defaults>
</compile_context>

<pallas_src>
import functools

import jax
import jax.numpy as jnp
from jax.experimental import pallas as pl
from jax.experimental.pallas import tpu as pltpu

LANE = 128


def _round_up(x, m):
    return ((x + m - 1) // m) * m


def _gcn_fused_kernel(adj_ref, x_ref, w_ref, b_ref, o_ref, acc_ref, act_ref,
                      *, tile, n_layers):
    l = pl.program_id(0)            # layer index (strictly sequential)
    i = pl.program_id(1)            # output row tile
    k = pl.program_id(2)            # reduction tile (adj cols / activation rows)
    last_k = pl.num_programs(2) - 1

    # Stage the padded input features into activation slot 1 exactly once so
    # every layer reads its input uniformly from the VMEM ping-pong buffer.
    @pl.when((l == 0) & (i == 0) & (k == 0))
    def _():
        act_ref[1, :, :] = x_ref[...].astype(act_ref.dtype)

    # Zero the f32 accumulator at the start of each k-reduction.
    @pl.when(k == 0)
    def _():
        acc_ref[...] = jnp.zeros_like(acc_ref)

    # acc += adj[row_tile, k_tile] @ act_prev[k_tile, :]   (MXU, f32 accumulate)
    read_slot = (l + 1) % 2         # layer 0 -> slot 1 (features), 1 -> 0, 2 -> 1
    k_start = pl.multiple_of(k * tile, tile)
    a_in = act_ref[read_slot, pl.ds(k_start, tile), :]
    acc_ref[...] += jnp.dot(adj_ref[...], a_in,
                            preferred_element_type=jnp.float32)

    # Epilogue only at the last k step: (adj @ h) @ W^T + b, optional ReLU.
    @pl.when(k == last_k)
    def _():
        h = jnp.dot(acc_ref[...].astype(w_ref.dtype), w_ref[...],
                    preferred_element_type=jnp.float32)
        h = h + b_ref[...]
        row_start = pl.multiple_of(i * tile, tile)

        @pl.when(l < n_layers - 1)
        def _():
            write_slot = l % 2
            act_ref[write_slot, pl.ds(row_start, tile), :] = (
                jnp.maximum(h, 0.0).astype(act_ref.dtype))

        @pl.when(l == n_layers - 1)
        def _():
            o_ref[pl.ds(row_start, tile), :] = h.astype(o_ref.dtype)


def gcn_forward(adj, features, params, *, compute_dtype=jnp.float32):
    """Fused 3-layer GCN forward: relu(g1) -> relu(g2) -> g3, one pallas_call."""
    n_layers = len(params)
    N = adj.shape[0]
    f_in0 = features.shape[1]
    n_class = params[-1][0].shape[0]

    dims = [f_in0] + [w.shape[0] for (w, _) in params]
    f_pad = max(_round_up(d, LANE) for d in dims)

    n_pad = _round_up(N, LANE)
    tile = next(t for t in (512, 256, 128) if n_pad % t == 0)
    r_tiles = n_pad // tile
    k_tiles = n_pad // tile

    # ---- host-side padding / packing (one-time layout plumbing) -------------
    adj_p = jnp.zeros((n_pad, n_pad), compute_dtype).at[:N, :N].set(
        adj.astype(compute_dtype))
    x_p = jnp.zeros((n_pad, f_pad), compute_dtype).at[:N, :f_in0].set(
        features.astype(compute_dtype))

    w_t_stack = jnp.zeros((n_layers, f_pad, f_pad), compute_dtype)
    b_stack = jnp.zeros((n_layers, 1, f_pad), jnp.float32)
    for idx, (w, b) in enumerate(params):
        f_out, f_in = w.shape
        w_t_stack = w_t_stack.at[idx, :f_in, :f_out].set(w.T.astype(compute_dtype))
        b_stack = b_stack.at[idx, 0, :f_out].set(b.astype(jnp.float32))

    kernel = functools.partial(_gcn_fused_kernel, tile=tile, n_layers=n_layers)
    out_padded = pl.pallas_call(
        kernel,
        out_shape=jax.ShapeDtypeStruct((n_pad, f_pad), jnp.float32),
        grid_spec=pltpu.PrefetchScalarGridSpec(
            num_scalar_prefetch=0,
            grid=(n_layers, r_tiles, k_tiles),
            in_specs=[
                # adj (row_tile, k_tile), streamed (re-streamed once per layer)
                pl.BlockSpec((tile, tile), lambda l, i, k: (i, k)),
                # padded input features, VMEM-resident for the whole kernel
                pl.BlockSpec((n_pad, f_pad), lambda l, i, k: (0, 0)),
                # stacked pre-transposed weights: one (f_pad, f_pad) slab / layer
                pl.BlockSpec((None, f_pad, f_pad), lambda l, i, k: (l, 0, 0)),
                # stacked biases: one (1, f_pad) row / layer
                pl.BlockSpec((None, 1, f_pad), lambda l, i, k: (l, 0, 0)),
            ],
            # Output stays VMEM-resident; single HBM writeback at the end.
            out_specs=pl.BlockSpec((n_pad, f_pad), lambda l, i, k: (0, 0)),
            scratch_shapes=[
                pltpu.VMEM((tile, f_pad), jnp.float32),        # adj@h accumulator
                pltpu.VMEM((2, n_pad, f_pad), compute_dtype),  # activation ping-pong
            ],
        ),
        compiler_params=pltpu.CompilerParams(
            # Layer axis is sequential; row/k axes feed a shared VMEM activation
            # buffer consumed by the next layer, so all axes are "arbitrary".
            dimension_semantics=("arbitrary", "arbitrary", "arbitrary"),
            vmem_limit_bytes=48 * 1024 * 1024,  # below v7x's 64 MiB physical
        ),
    )(adj_p, x_p, w_t_stack, b_stack)

    return out_padded[:N, :n_class]


def init_linear_params(key, in_features, out_features):
    """Deterministic nn.Linear-style init: U(-1/sqrt(fan_in), 1/sqrt(fan_in))."""
    kw, kb = jax.random.split(key)
    bound = 1.0 / jnp.sqrt(jnp.float32(in_features))
    w = jax.random.uniform(kw, (out_features, in_features), jnp.float32,
                           minval=-bound, maxval=bound)
    b = jax.random.uniform(kb, (out_features,), jnp.float32,
                           minval=-bound, maxval=bound)
    return w, b


def gcn_reference(adj, features, params):
    (w1, b1), (w2, b2), (w3, b3) = params
    out = jnp.maximum(adj @ features @ w1.T + b1, 0.0)
    out = jnp.maximum(adj @ out @ w2.T + b2, 0.0)
    out = adj @ out @ w3.T + b3
    return out


if __name__ == "__main__":
    # Small synthetic problem matching the PyTorch module: N=16 nodes,
    # input_dim=32, hidden1=16, hidden2=16, n_class=7.
    N, input_dim, hidden1, hidden2, n_class = 16, 32, 16, 16, 7

    key = jax.random.PRNGKey(0)
    k_adj, k_feat, k1, k2, k3 = jax.random.split(key, 5)

    # Symmetric row-normalized adjacency with self-loops (typical GCN input).
    a = jax.random.uniform(k_adj, (N, N), jnp.float32)
    a = (a > 0.7).astype(jnp.float32)
    a = jnp.maximum(a, a.T) + jnp.eye(N, dtype=jnp.float32)
    adj = a / jnp.sum(a, axis=1, keepdims=True)

    features = jax.random.normal(k_feat, (N, input_dim), jnp.float32)

    params = (
        init_linear_params(k1, input_dim, hidden1),
        init_linear_params(k2, hidden1, hidden2),
        init_linear_params(k3, hidden2, n_class),
    )

    out = gcn_forward(adj, features, params)  # f32 compute -> matches reference
    out = jax.block_until_ready(out)

    ref = gcn_reference(adj, features, params)
    assert out.shape == (N, n_class)
    assert jnp.allclose(out, ref, atol=1e-3, rtol=1e-3)

    print("KERNEL_OK")
</pallas_src>

<mosaic_0001>
module attributes {stable_mosaic.version = 11 : i64} {
  func.func @_gcn_fused_kernel(%arg0: i32, %arg1: i32, %arg2: i32, %arg3: memref<128x128xf32, #tpu.memory_space<vmem>>, %arg4: memref<128x128xf32, #tpu.memory_space<vmem>>, %arg5: memref<1x128x128xf32, #tpu.memory_space<vmem>>, %arg6: memref<1x1x128xf32, #tpu.memory_space<vmem>>, %arg7: memref<128x128xf32, #tpu.memory_space<vmem>>, %arg8: memref<128x128xf32, #tpu.memory_space<vmem>>, %arg9: memref<2x128x128xf32, #tpu.memory_space<vmem>>) attributes {dimension_semantics = [#tpu.dimension_semantics<arbitrary>, #tpu.dimension_semantics<arbitrary>, #tpu.dimension_semantics<arbitrary>], iteration_bounds = array<i64: 3, 1, 1>, scalar_prefetch = 0 : i64, scratch_operands = 2 : i64, tpu.core_type = #tpu.core_type<tc>, window_params = [{transform_indices = @transform_0, window_bounds = array<i64: 128, 128>}, {pipeline_mode = #tpu.pipeline_mode<synchronous>, transform_indices = @transform_1, window_bounds = array<i64: 128, 128>}, {transform_indices = @transform_2, window_bounds = array<i64: 1, 128, 128>}, {transform_indices = @transform_3, window_bounds = array<i64: 1, 1, 128>}, {pipeline_mode = #tpu.pipeline_mode<synchronous>, transform_indices = @transform_4, window_bounds = array<i64: 128, 128>}]} {
    %c0_i32 = arith.constant 0 : i32
    %0 = arith.cmpi eq, %arg0, %c0_i32 : i32
    %c0_i32_0 = arith.constant 0 : i32
    %1 = arith.cmpi eq, %arg1, %c0_i32_0 : i32
    %2 = arith.andi %0, %1 : i1
    %c0_i32_1 = arith.constant 0 : i32
    %3 = arith.cmpi eq, %arg2, %c0_i32_1 : i32
    %4 = arith.andi %2, %3 : i1
    %5 = arith.extui %4 : i1 to i32
    %c0_i32_2 = arith.constant 0 : i32
    %6 = arith.cmpi ne, %5, %c0_i32_2 : i32
    scf.if %6 {
      %c0_18 = arith.constant 0 : index
      %c0_19 = arith.constant 0 : index
      %35 = vector.load %arg4[%c0_18, %c0_19] : memref<128x128xf32, #tpu.memory_space<vmem>>, vector<128x128xf32>
      %c1 = arith.constant 1 : index
      %c0_20 = arith.constant 0 : index
      %c0_21 = arith.constant 0 : index
      %36 = vector.load %arg9[%c1, %c0_20, %c0_21] : memref<2x128x128xf32, #tpu.memory_space<vmem>>, vector<1x128x128xf32>
      %37 = vector.shape_cast %36 : vector<1x128x128xf32> to vector<128x128xf32>
      %38 = vector.shape_cast %35 : vector<128x128xf32> to vector<1x128x128xf32>
      tpu.vector_store %arg9[%c1, %c0_20, %c0_21], %38 {strides = array<i32>} : memref<2x128x128xf32, #tpu.memory_space<vmem>>, vector<1x128x128xf32>,
    } else {
    }
    %c0_i32_3 = arith.constant 0 : i32
    %7 = arith.cmpi eq, %arg2, %c0_i32_3 : i32
    %8 = arith.extui %7 : i1 to i32
    %c0_i32_4 = arith.constant 0 : i32
    %9 = arith.cmpi ne, %8, %c0_i32_4 : i32
    scf.if %9 {
      %cst_18 = arith.constant 0.000000e+00 : f32
      %35 = vector.broadcast %cst_18 : f32 to vector<128x128xf32>
      %c0_19 = arith.constant 0 : index
      %c0_20 = arith.constant 0 : index
      %36 = vector.load %arg8[%c0_19, %c0_20] : memref<128x128xf32, #tpu.memory_space<vmem>>, vector<128x128xf32>
      tpu.vector_store %arg8[%c0_19, %c0_20], %35 {strides = array<i32>} : memref<128x128xf32, #tpu.memory_space<vmem>>, vector<128x128xf32>,
    } else {
    }
    %c1_i32 = arith.constant 1 : i32
    %10 = arith.addi %arg0, %c1_i32 : i32
    %c2_i32 = arith.constant 2 : i32
    %c0_i32_5 = arith.constant 0 : i32
    %11 = arith.cmpi eq, %c2_i32, %c0_i32_5 : i32
    %c1_i32_6 = arith.constant 1 : i32
    %12 = arith.select %11, %c1_i32_6, %c2_i32 : i32
    %13 = arith.remsi %10, %12 : i32
    %c0_i32_7 = arith.constant 0 : i32
    %14 = arith.cmpi ne, %13, %c0_i32_7 : i32
    %c0_i32_8 = arith.constant 0 : i32
    %15 = arith.cmpi slt, %13, %c0_i32_8 : i32
    %c0_i32_9 = arith.constant 0 : i32
    %16 = arith.cmpi slt, %12, %c0_i32_9 : i32
    %17 = arith.xori %15, %16 : i1
    %18 = arith.andi %17, %14 : i1
    %19 = arith.addi %13, %12 : i32
    %20 = arith.select %18, %19, %13 : i32
    %c128_i32 = arith.constant 128 : i32
    %21 = arith.muli %arg2, %c128_i32 : i32
    %22 = tpu.assume_multiple %21, 128 : i32
    %23 = arith.index_cast %20 : i32 to index
    %24 = arith.index_cast %22 : i32 to index
    %c0 = arith.constant 0 : index
    %25 = vector.load %arg9[%23, %24, %c0] : memref<2x128x128xf32, #tpu.memory_space<vmem>>, vector<1x128x128xf32>
    %26 = vector.shape_cast %25 : vector<1x128x128xf32> to vector<128x128xf32>
    %c0_10 = arith.constant 0 : index
    %c0_11 = arith.constant 0 : index
    %27 = vector.load %arg8[%c0_10, %c0_11] : memref<128x128xf32, #tpu.memory_space<vmem>>, vector<128x128xf32>
    %c0_12 = arith.constant 0 : index
    %c0_13 = arith.constant 0 : index
    %28 = vector.load %arg3[%c0_12, %c0_13] : memref<128x128xf32, #tpu.memory_space<vmem>>, vector<128x128xf32>
    %cst = arith.constant dense<0.000000e+00> : vector<128x128xf32>
    %29 = tpu.matmul %28, %26, %cst {dimension_numbers = #tpu.dot_dimension_numbers<[1], [0], [0], [1], [0, 0, 1, 1], [], []>} : vector<128x128xf32>, vector<128x128xf32>, vector<128x128xf32> -> vector<128x128xf32>
    %30 = arith.addf %27, %29 : vector<128x128xf32>
    %c0_14 = arith.constant 0 : index
    %c0_15 = arith.constant 0 : index
    %31 = vector.load %arg8[%c0_14, %c0_15] : memref<128x128xf32, #tpu.memory_space<vmem>>, vector<128x128xf32>
    tpu.vector_store %arg8[%c0_14, %c0_15], %30 {strides = array<i32>} : memref<128x128xf32, #tpu.memory_space<vmem>>, vector<128x128xf32>,
    %c0_i32_16 = arith.constant 0 : i32
    %32 = arith.cmpi eq, %arg2, %c0_i32_16 : i32
    %33 = arith.extui %32 : i1 to i32
    %c0_i32_17 = arith.constant 0 : i32
    %34 = arith.cmpi ne, %33, %c0_i32_17 : i32
    scf.if %34 {
      %c0_18 = arith.constant 0 : index
      %c0_19 = arith.constant 0 : index
      %35 = vector.load %arg8[%c0_18, %c0_19] : memref<128x128xf32, #tpu.memory_space<vmem>>, vector<128x128xf32>
      %c0_20 = arith.constant 0 : index
      %c0_21 = arith.constant 0 : index
      %c0_22 = arith.constant 0 : index
      %36 = vector.load %arg5[%c0_20, %c0_21, %c0_22] : memref<1x128x128xf32, #tpu.memory_space<vmem>>, vector<1x128x128xf32>
      %37 = vector.shape_cast %36 : vector<1x128x128xf32> to vector<128x128xf32>
      %cst_23 = arith.constant dense<0.000000e+00> : vector<128x128xf32>
      %38 = tpu.matmul %35, %37, %cst_23 {dimension_numbers = #tpu.dot_dimension_numbers<[1], [0], [0], [1], [0, 0, 1, 1], [], []>} : vector<128x128xf32>, vector<128x128xf32>, vector<128x128xf32> -> vector<128x128xf32>
      %c0_24 = arith.constant 0 : index
      %c0_25 = arith.constant 0 : index
      %c0_26 = arith.constant 0 : index
      %39 = vector.load %arg6[%c0_24, %c0_25, %c0_26] : memref<1x1x128xf32, #tpu.memory_space<vmem>>, vector<1x1x128xf32>
      %40 = vector.shape_cast %39 : vector<1x1x128xf32> to vector<1x128xf32>
      %41 = vector.broadcast %40 : vector<1x128xf32> to vector<128x128xf32>
      %42 = arith.addf %38, %41 : vector<128x128xf32>
      %c128_i32_27 = arith.constant 128 : i32
      %43 = arith.muli %arg1, %c128_i32_27 : i32
      %44 = tpu.assume_multiple %43, 128 : i32
      %c2_i32_28 = arith.constant 2 : i32
      %45 = arith.cmpi slt, %arg0, %c2_i32_28 : i32
      %46 = arith.extui %45 : i1 to i32
      %c0_i32_29 = arith.constant 0 : i32
      %47 = arith.cmpi ne, %46, %c0_i32_29 : i32
      scf.if %47 {
        %c2_i32_32 = arith.constant 2 : i32
        %c0_i32_33 = arith.constant 0 : i32
        %51 = arith.cmpi eq, %c2_i32_32, %c0_i32_33 : i32
        %c1_i32_34 = arith.constant 1 : i32
        %52 = arith.select %51, %c1_i32_34, %c2_i32_32 : i32
        %53 = arith.remsi %arg0, %52 : i32
        %c0_i32_35 = arith.constant 0 : i32
        %54 = arith.cmpi ne, %53, %c0_i32_35 : i32
        %c0_i32_36 = arith.constant 0 : i32
        %55 = arith.cmpi slt, %53, %c0_i32_36 : i32
        %c0_i32_37 = arith.constant 0 : i32
        %56 = arith.cmpi slt, %52, %c0_i32_37 : i32
        %57 = arith.xori %55, %56 : i1
        %58 = arith.andi %57, %54 : i1
        %59 = arith.addi %53, %52 : i32
        %60 = arith.select %58, %59, %53 : i32
        %cst_38 = arith.constant 0.000000e+00 : f32
        %61 = vector.broadcast %cst_38 : f32 to vector<128x128xf32>
        %62 = arith.maximumf %42, %61 : vector<128x128xf32>
        %63 = arith.index_cast %60 : i32 to index
        %64 = arith.index_cast %44 : i32 to index
        %c0_39 = arith.constant 0 : index
        %65 = vector.load %arg9[%63, %64, %c0_39] : memref<2x128x128xf32, #tpu.memory_space<vmem>>, vector<1x128x128xf32>
        %66 = vector.shape_cast %65 : vector<1x128x128xf32> to vector<128x128xf32>
        %67 = vector.shape_cast %62 : vector<128x128xf32> to vector<1x128x128xf32>
        tpu.vector_store %arg9[%63, %64, %c0_39], %67 {strides = array<i32>} : memref<2x128x128xf32, #tpu.memory_space<vmem>>, vector<1x128x128xf32>,
      } else {
      }
      %c2_i32_30 = arith.constant 2 : i32
      %48 = arith.cmpi eq, %arg0, %c2_i32_30 : i32
      %49 = arith.extui %48 : i1 to i32
      %c0_i32_31 = arith.constant 0 : i32
      %50 = arith.cmpi ne, %49, %c0_i32_31 : i32
      scf.if %50 {
        %51 = arith.index_cast %44 : i32 to index
        %c0_32 = arith.constant 0 : index
        %52 = vector.load %arg7[%51, %c0_32] : memref<128x128xf32, #tpu.memory_space<vmem>>, vector<128x128xf32>
        tpu.vector_store %arg7[%51, %c0_32], %42 {strides = array<i32>} : memref<128x128xf32, #tpu.memory_space<vmem>>, vector<128x128xf32>,
      } else {
      }
    } else {
    }
    return
  }
  func.func @transform_0(%arg0: i32, %arg1: i32, %arg2: i32) -> (i32, i32) {
    %c0_i32 = arith.constant 0 : i32
    return %arg1, %arg2 : i32, i32
  }
  func.func @transform_1(%arg0: i32, %arg1: i32, %arg2: i32) -> (i32, i32) {
    %c0_i32 = arith.constant 0 : i32
    %c0_i32_0 = arith.constant 0 : i32
    %c0_i32_1 = arith.constant 0 : i32
    return %c0_i32, %c0_i32_0 : i32, i32
  }
  func.func @transform_2(%arg0: i32, %arg1: i32, %arg2: i32) -> (i32, i32, i32) {
    %c0_i32 = arith.constant 0 : i32
    %c0_i32_0 = arith.constant 0 : i32
    %c0_i32_1 = arith.constant 0 : i32
    return %arg0, %c0_i32, %c0_i32_0 : i32, i32, i32
  }
  func.func @transform_3(%arg0: i32, %arg1: i32, %arg2: i32) -> (i32, i32, i32) {
    %c0_i32 = arith.constant 0 : i32
    %c0_i32_0 = arith.constant 0 : i32
    %c0_i32_1 = arith.constant 0 : i32
    return %arg0, %c0_i32, %c0_i32_0 : i32, i32, i32
  }
  func.func @transform_4(%arg0: i32, %arg1: i32, %arg2: i32) -> (i32, i32) {
    %c0_i32 = arith.constant 0 : i32
    %c0_i32_0 = arith.constant 0 : i32
    %c0_i32_1 = arith.constant 0 : i32
    return %c0_i32, %c0_i32_0 : i32, i32
  }
}

</mosaic_0001>

<llo_original>
// kernel: tpu_custom_call.1
$region0: #{tpu_custom_call.1}
  #allocation0 [shape = 'u32[]', space=smem, size = 0x4, offset = 0x4, fixed_abs, tag = 'smem constant byte address 0x4 - core index']
  #allocation1 [shape = 'u32[144,128]{1,0:T(1,128)}', space=vmem, size = 0x12000, scoped, tag = 'internal scratch']
  #allocation2 [shape = 'f32[128,128]{1,0:T(8,128)}', space=vmem, size = 0x10000, scoped, tag = 'scratch operand']
  #allocation3 [shape = 'f32[2,128,128]{2,1,0:T(8,128)}', space=vmem, size = 0x20000, scoped, tag = 'scratch operand']
  %s0 = inlined_call_operand.hbm [shape: f32[128,128], index: 0, kind: input, shape index: {}]
  %s1 = inlined_call_operand.hbm [shape: f32[128,128], index: 1, kind: input, shape index: {}]
  %s2 = inlined_call_operand.hbm [shape: f32[3,128,128], index: 2, kind: input, shape index: {}]
  %s3 = inlined_call_operand.vmem [shape: f32[3,1,128], index: 3, kind: input, shape index: {}]
  %s4 = inlined_call_operand.hbm [shape: f32[128,128], index: 4, kind: output, shape index: {}]
  %s5 = sld [smem:[#allocation0]]
  $region81: #{tpu_custom_call.1} parent=0
    _
  %s7 = ssub.s32 1, %s5
  %s8 = scalar_select 0, %s7, %s5
  $region1: #{tpu_custom_call.1} parent=0
    #allocation4 [shape = 'u8[65536]{0}', space=vmem, size = 0x10000, scoped, tag = 'input window, operand 0, single buffered']
    #allocation5 [shape = 's32[2]{0}', space=sflag, size = 0x8, scoped, tag = 'scoped memory for tpu_custom_call.1']
    #allocation6 [shape = 's32[2]{0}', space=sflag, size = 0x8, scoped, tag = 'scoped memory for tpu_custom_call.1']
    #allocation7 [shape = 'u8[65536]{0}', space=vmem, size = 0x10000, scoped, tag = 'input window, operand 1, single buffered']
    #allocation8 [shape = 's32[1]{0}', space=sflag, size = 0x4, scoped, tag = 'scoped memory for tpu_custom_call.1']
    #allocation9 [shape = 'u8[131072]{0}', space=vmem, size = 0x20000, scoped, tag = 'input window, operand 2']
    #allocation10 [shape = 'u8[65536]{0}', space=vmem, size = 0x10000, scoped, tag = 'output window, operand 0, single buffered']
    %9 = vsyncpa [#allocation5], 0
    %10 = vsyncpa [#allocation8], 0
    %11 = vsyncpa [#allocation6], 0
    loop: start=0, step=1, limit=5
    $region2: #{tpu_custom_call.1} parent=1 // loop_pre_header
      _
    $region3: #{tpu_custom_call.1} parent=1 // loop_header
      %s13 = sphi 0, %s17
      %p14 = scmp.ge.s32.totalorder %s13, 5
      %s20 = sphi 0, %s39
      %s21 = sphi 0, %s35
      %s22 = sphi 0, %s31
      %s23 = sphi 0, %s20
      %s24 = sphi 0, %s21
      %s25 = sphi 0, %s22
      %s26 = sphi 0, %s23
      %s27 = sphi 0, %s24
      %s28 = sphi 0, %s25
      %s44 = sphi 0, %s46
      %s47 = sphi 0, %s44
      %s48 = sphi 0, %s47
      %s64 = sphi 0, %s48
      %s68 = sphi 0, %s68
      %s70 = sphi 0, %s68
      %s71 = sphi 0, %s70
      %s85 = sphi 0, %s71
      %s91 = sphi 0, %s93
      %s94 = sphi 0, %s91
      %s95 = sphi 0, %s94
      %s111 = sphi 0, %s95
      %s117 = sphi 0, %s119
      %s120 = sphi 0, %s117
      %s121 = sphi 0, %s120
      %s137 = sphi 0, %s121
      %s141 = sphi 0, %s141
      %s143 = sphi 0, %s141
      %s144 = sphi 0, %s143
      %s158 = sphi 0, %s144
    $region4: #{tpu_custom_call.1} parent=1 // loop_header_branch
      %16 = sbr.rel (%p14) target = $region8
    $region5: #{tpu_custom_call.1} parent=1 // loop_body
      %s18 = ssub.s32 %s13, 1
      %s19 = ssub.s32 %s13, 2
      %s29 = sadd.s32 1, %s22
      %p30 = scmp.ge.s32.totalorder %s29, 1
      %s31 = scalar_select %p30, 0, %s29
      %s32 = sadd.s32 1, %s21
      %s33 = scalar_select %p30, %s32, %s21
      %p34 = scmp.ge.s32.totalorder %s33, 1
      %s35 = scalar_select %p34, 0, %s33
      %s36 = sadd.s32 1, %s20
      %s37 = scalar_select %p34, %s36, %s20
      %p38 = scmp.ge.s32.totalorder %s37, 3
      %s39 = scalar_select %p38, 0, %s37
      %s40 = ssub.s32 %s21, %s35
      %s41 = ssub.s32 %s22, %s31
      %s42 = sor.u32 %s40, %s41
      %p43 = scmp.eq.s32.totalorder %s42, 0
      %s45 = sadd.s32 %s44, 1
      %s46 = scalar_select %p43, %s44, %s45
      %p49 = pneg %p43
      %p50 = scmp.eq.s32.totalorder %s13, 2
      %p51 = por %p49, %p50
      %p52 = scmp.ne.s32.totalorder %s44, %s47
      %p53 = scmp.eq.s32.totalorder %s13, 0
      %p54 = por %p52, %p53
      %p55 = scmp.ne.s32.totalorder %s44, %s47
      %p56 = scmp.eq.s32.totalorder %s18, 2
      %p57 = por %p55, %p56
      %p58 = scmp.ne.s32.totalorder %s47, %s48
      %p59 = scmp.eq.s32.totalorder %s18, 0
      %p60 = por %p58, %p59
      %p61 = scmp.ne.s32.totalorder %s47, %s48
      %p62 = scmp.eq.s32.totalorder %s19, 2
      %p63 = por %p61, %p62
      %p65 = scmp.ne.s32.totalorder %s48, %s64
      %p66 = scmp.eq.s32.totalorder %s19, 0
      %p67 = por %p65, %p66
      %s69 = sadd.s32 %s68, 1
      %p72 = scmp.eq.s32.totalorder %s13, 2
      %p73 = scmp.ne.s32.totalorder %s68, %s70
      %p74 = scmp.eq.s32.totalorder %s13, 0
      %p75 = por %p73, %p74
      %p76 = scmp.ne.s32.totalorder %s68, %s70
      %p77 = scmp.eq.s32.totalorder %s18, 2
      %p78 = por %p76, %p77
      %p79 = scmp.ne.s32.totalorder %s70, %s71
      %p80 = scmp.eq.s32.totalorder %s18, 0
      %p81 = por %p79, %p80
      %p82 = scmp.ne.s32.totalorder %s70, %s71
      %p83 = scmp.eq.s32.totalorder %s19, 2
      %p84 = por %p82, %p83
      %p86 = scmp.ne.s32.totalorder %s71, %s85
      %p87 = scmp.eq.s32.totalorder %s19, 0
      %p88 = por %p86, %p87
      %s89 = ssub.s32 %s20, %s39
      %p90 = scmp.eq.s32.totalorder %s89, 0
      %s92 = sadd.s32 %s91, 1
      %s93 = scalar_select %p90, %s91, %s92
      %p96 = pneg %p90
      %p97 = scmp.eq.s32.totalorder %s13, 2
      %p98 = por %p96, %p97
      %p99 = scmp.ne.s32.totalorder %s91, %s94
      %p100 = scmp.eq.s32.totalorder %s13, 0
      %p101 = por %p99, %p100
      %p102 = scmp.ne.s32.totalorder %s91, %s94
      %p103 = scmp.eq.s32.totalorder %s18, 2
      %p104 = por %p102, %p103
      %p105 = scmp.ne.s32.totalorder %s94, %s95
      %p106 = scmp.eq.s32.totalorder %s18, 0
      %p107 = por %p105, %p106
      %p108 = scmp.ne.s32.totalorder %s94, %s95
      %p109 = scmp.eq.s32.totalorder %s19, 2
      %p110 = por %p108, %p109
      %p112 = scmp.ne.s32.totalorder %s95, %s111
      %p113 = scmp.eq.s32.totalorder %s19, 0
      %p114 = por %p112, %p113
      %s115 = ssub.s32 %s20, %s39
      %p116 = scmp.eq.s32.totalorder %s115, 0
      %s118 = sadd.s32 %s117, 1
      %s119 = scalar_select %p116, %s117, %s118
      %p122 = pneg %p116
      %p123 = scmp.eq.s32.totalorder %s13, 2
      %p124 = por %p122, %p123
      %p125 = scmp.ne.s32.totalorder %s117, %s120
      %p126 = scmp.eq.s32.totalorder %s13, 0
      %p127 = por %p125, %p126
      %p128 = scmp.ne.s32.totalorder %s117, %s120
      %p129 = scmp.eq.s32.totalorder %s18, 2
      %p130 = por %p128, %p129
      %p131 = scmp.ne.s32.totalorder %s120, %s121
      %p132 = scmp.eq.s32.totalorder %s18, 0
      %p133 = por %p131, %p132
      %p134 = scmp.ne.s32.totalorder %s120, %s121
      %p135 = scmp.eq.s32.totalorder %s19, 2
      %p136 = por %p134, %p135
      %p138 = scmp.ne.s32.totalorder %s121, %s137
      %p139 = scmp.eq.s32.totalorder %s19, 0
      %p140 = por %p138, %p139
      %s142 = sadd.s32 %s141, 1
      %p145 = scmp.eq.s32.totalorder %s13, 2
      %p146 = scmp.ne.s32.totalorder %s141, %s143
      %p147 = scmp.eq.s32.totalorder %s13, 0
      %p148 = por %p146, %p147
      %p149 = scmp.ne.s32.totalorder %s141, %s143
      %p150 = scmp.eq.s32.totalorder %s18, 2
      %p151 = por %p149, %p150
      %p152 = scmp.ne.s32.totalorder %s143, %s144
      %p153 = scmp.eq.s32.totalorder %s18, 0
      %p154 = por %p152, %p153
      %p155 = scmp.ne.s32.totalorder %s143, %s144
      %p156 = scmp.eq.s32.totalorder %s19, 2
      %p157 = por %p155, %p156
      %p159 = scmp.ne.s32.totalorder %s144, %s158
      %p160 = scmp.eq.s32.totalorder %s19, 0
      %p161 = por %p159, %p160
      %p162 = scmp.le.s32.totalorder 1, %s13
      %p163 = scmp.lt.s32.totalorder %s13, 4
      %p164 = pnand %p162, %p163
      %p165 = pneg %p164
      // Predicated region
      $region9: #{tpu_custom_call.1} parent=5 // pred_check
        _
      $region10: #{tpu_custom_call.1} parent=5 // pred_check_branch
        %167 = sbr.rel (%p164) target = $region12
      $region11: #{tpu_custom_call.1} parent=5 // pred_region
        %s168 = ssub.s32 %s13, 1
        // Predicated region
        $region13: #{tpu_custom_call.1} parent=11 // pred_check
          %p169 = pneg %p60
        $region14: #{tpu_custom_call.1} parent=11 // pred_check_branch
          %171 = sbr.rel (%p169) target = $region16
        $region15: #{tpu_custom_call.1} parent=11 // pred_region
          %s172 = smul.u32 16, %s24
          %s174 = ssub.s32 2048, 2048
          %175 = vsyncadd [#allocation5], %s174
          %s176 = sadd.s32 %s25, %s172
          %s177 = smul.addr %s176, 128
          %s178 = scalar_lea.hbm %s0, %s177
          %s179 = sshll.u32 [#allocation4], 4
          %s180 = int_to_ptr.vmem [resolvable:$true] %s179
          %185 = dma.hbm_to_vmem [thread:$0]  %s178, 2048, %s180, [#allocation5], 128, 128, 8
        $region16: #{tpu_custom_call.1} parent=11 // pred_fallthru
          _
        // Predicated region
        $region17: #{tpu_custom_call.1} parent=11 // pred_check
          %p186 = pneg %p81
        $region18: #{tpu_custom_call.1} parent=11 // pred_check_branch
          %188 = sbr.rel (%p186) target = $region20
        $region19: #{tpu_custom_call.1} parent=11 // pred_region
          %s190 = ssub.s32 2048, 2048
          %191 = vsyncadd [#allocation8], %s190
          %s192 = sshll.u32 [#allocation7], 4
          %s193 = int_to_ptr.vmem [resolvable:$true] %s192
          %198 = dma.hbm_to_vmem [thread:$0]  %s1, 2048, %s193, [#allocation8], 128, 128, 8
        $region20: #{tpu_custom_call.1} parent=11 // pred_fallthru
          _
      $region12: #{tpu_custom_call.1} parent=5 // pred_fallthru
        _
      %p199 = scmp.lt.s32.totalorder %s13, 3
      // Predicated region
      $region21: #{tpu_custom_call.1} parent=5 // pred_check
        %p200 = pneg %p199
      $region22: #{tpu_custom_call.1} parent=5 // pred_check_branch
        %202 = sbr.rel (%p200) target = $region24
      $region23: #{tpu_custom_call.1} parent=5 // pred_region
        // Predicated region
        $region25: #{tpu_custom_call.1} parent=23 // pred_check
          %p203 = pneg %p101
        $region26: #{tpu_custom_call.1} parent=23 // pred_check_branch
          %205 = sbr.rel (%p203) target = $region28
        $region27: #{tpu_custom_call.1} parent=23 // pred_region
          %s206 = sand.u32 %s13, 1
          %s207 = scalar_lea.sflag [#allocation5], %s206
          %s208 = sand.u32 %s91, 1
          %s209 = smul.addr %s208, 128
          %s210 = scalar_lea.vmem [#allocation9], %s209
          %s212 = ssub.s32 2048, 2048
          %213 = vsyncadd %s207, %s212
          %s214 = smul.addr %s20, 16
          %s215 = smul.addr %s214, 128
          %s216 = scalar_lea.hbm %s2, %s215
          %s217 = sshll.u32 %s210, 4
          %s218 = int_to_ptr.vmem [resolvable:$true] %s217
          %223 = dma.hbm_to_vmem [thread:$0]  %s216, 2048, %s218, %s207, 128, 128, 8
        $region28: #{tpu_custom_call.1} parent=23 // pred_fallthru
          _
        // Predicated region
        $region29: #{tpu_custom_call.1} parent=23 // pred_check
          %p224 = pneg %p127
        $region30: #{tpu_custom_call.1} parent=23 // pred_check_branch
          %226 = sbr.rel (%p224) target = $region32
        $region31: #{tpu_custom_call.1} parent=23 // pred_region
          %p227 = scmp.lt.s32.totalorder %s20, 2
          %s228 = scalar_select %p227, %s20, 2
          %s229 = scalar_lea.vmem %s3, %s228
        $region32: #{tpu_custom_call.1} parent=23 // pred_fallthru
          _
      $region24: #{tpu_custom_call.1} parent=5 // pred_fallthru
        _
      %p230 = scmp.le.s32.totalorder 1, %s13
      %p231 = scmp.lt.s32.totalorder %s13, 4
      %p232 = pnand %p230, %p231
      %p233 = pneg %p232
      // Predicated region
      $region33: #{tpu_custom_call.1} parent=5 // pred_check
        _
      $region34: #{tpu_custom_call.1} parent=5 // pred_check_branch
        %235 = sbr.rel (%p232) target = $region36
      $region35: #{tpu_custom_call.1} parent=5 // pred_region
        %s236 = ssub.s32 %s13, 1
        // Predicated region
        $region37: #{tpu_custom_call.1} parent=35 // pred_check
          %p237 = pneg %p60
        $region38: #{tpu_custom_call.1} parent=35 // pred_check_branch
          %239 = sbr.rel (%p237) target = $region40
        $region39: #{tpu_custom_call.1} parent=35 // pred_region
          %240 = dma.done [#allocation5], 2048
        $region40: #{tpu_custom_call.1} parent=35 // pred_fallthru
          _
        // Predicated region
        $region41: #{tpu_custom_call.1} parent=35 // pred_check
          %p241 = pneg %p81
        $region42: #{tpu_custom_call.1} parent=35 // pred_check_branch
          %243 = sbr.rel (%p241) target = $region44
        $region43: #{tpu_custom_call.1} parent=35 // pred_region
          %244 = dma.done [#allocation8], 2048
        $region44: #{tpu_custom_call.1} parent=35 // pred_fallthru
          _
        %s245 = sand.u32 %s18, 1
        %s246 = scalar_lea.sflag [#allocation5], %s245
        %s247 = sand.u32 %s94, 1
        %s248 = smul.addr %s247, 128
        %s249 = scalar_lea.vmem [#allocation9], %s248
        // Predicated region
        $region45: #{tpu_custom_call.1} parent=35 // pred_check
          %p250 = pneg %p107
        $region46: #{tpu_custom_call.1} parent=35 // pred_check_branch
          %252 = sbr.rel (%p250) target = $region48
        $region47: #{tpu_custom_call.1} parent=35 // pred_region
          %253 = dma.done %s246, 2048
        $region48: #{tpu_custom_call.1} parent=35 // pred_fallthru
          _
        %p254 = pneg %p60
        %p255 = pneg %p57
        %p256 = pneg %p81
        %p257 = pneg %p78
        %s258 = sand.u32 %s18, 1
        %s259 = scalar_lea.sflag [#allocation5], %s258
        %s260 = sand.u32 %s94, 1
        %s261 = smul.addr %s260, 128
        %s262 = scalar_lea.vmem [#allocation9], %s261
        %p263 = pneg %p107
        %p264 = pneg %p104
        %p265 = scmp.lt.s32.totalorder %s23, 2
        %s266 = scalar_select %p265, %s23, 2
        %s267 = scalar_lea.vmem %s3, %s266
        %p268 = pneg %p133
        %p269 = pneg %p130
        %p270 = pneg %p154
        %p271 = pneg %p151
        %s272 = smul.u32 16, %s24
        %p273 = scmp.lt.s32.totalorder %s23, 2
        %s274 = scalar_select %p273, %s23, 2
        %s275 = scalar_lea.vmem %s3, %s274
        %p276 = scmp.eq.s32.totalorder %s23, 0
        %p277 = scmp.eq.s32.totalorder %s24, 0
        %p278 = pnand %p276, %p277
        %p279 = pneg %p278
        %p280 = scmp.eq.s32.totalorder %s25, 0
        %p281 = pnand %p279, %p280
        %p282 = pneg %p281
        // Predicated region
        $region49: #{tpu_custom_call.1} parent=35 // pred_check
          _
        $region50: #{tpu_custom_call.1} parent=35 // pred_check_branch
          %284 = sbr.rel (%p281) target = $region52
        $region51: #{tpu_custom_call.1} parent=35 // pred_region
          %v285 = vld [vmem:[#allocation7] sm:$0xff]
          %v286 = vld [vmem:[#allocation7 + $0x8] sm:$0xff]
          %v287 = vld [vmem:[#allocation7 + $0x10] sm:$0xff]
          %v288 = vld [vmem:[#allocation7 + $0x18] sm:$0xff]
          %v289 = vld [vmem:[#allocation7 + $0x20] sm:$0xff]
          %v290 = vld [vmem:[#allocation7 + $0x28] sm:$0xff]
          %v291 = vld [vmem:[#allocation7 + $0x30] sm:$0xff]
          %v292 = vld [vmem:[#allocation7 + $0x38] sm:$0xff]
          %v293 = vld [vmem:[#allocation7 + $0x40] sm:$0xff]
          %v294 = vld [vmem:[#allocation7 + $0x48] sm:$0xff]
          %v295 = vld [vmem:[#allocation7 + $0x50] sm:$0xff]
          %v296 = vld [vmem:[#allocation7 + $0x58] sm:$0xff]
          %v297 = vld [vmem:[#allocation7 + $0x60] sm:$0xff]
          %v298 = vld [vmem:[#allocation7 + $0x68] sm:$0xff]
          %v299 = vld [vmem:[#allocation7 + $0x70] sm:$0xff]
          %v300 = vld [vmem:[#allocation7 + $0x78] sm:$0xff]
          %s301 = scalar_lea.vmem [#allocation3], 128
          %302 = vst [vmem:[%s301] sm:$0xff] %v285
          %303 = vst [vmem:[%s301 + $0x8] sm:$0xff] %v286
          %304 = vst [vmem:[%s301 + $0x10] sm:$0xff] %v287
          %305 = vst [vmem:[%s301 + $0x18] sm:$0xff] %v288
          %306 = vst [vmem:[%s301 + $0x20] sm:$0xff] %v289
          %307 = vst [vmem:[%s301 + $0x28] sm:$0xff] %v290
          %308 = vst [vmem:[%s301 + $0x30] sm:$0xff] %v291
          %309 = vst [vmem:[%s301 + $0x38] sm:$0xff] %v292
          %310 = vst [vmem:[%s301 + $0x40] sm:$0xff] %v293
          %311 = vst [vmem:[%s301 + $0x48] sm:$0xff] %v294
          %312 = vst [vmem:[%s301 + $0x50] sm:$0xff] %v295
          %313 = vst [vmem:[%s301 + $0x58] sm:$0xff] %v296
          %314 = vst [vmem:[%s301 + $0x60] sm:$0xff] %v297
          %315 = vst [vmem:[%s301 + $0x68] sm:$0xff] %v298
          %316 = vst [vmem:[%s301 + $0x70] sm:$0xff] %v299
          %317 = vst [vmem:[%s301 + $0x78] sm:$0xff] %v300
        $region52: #{tpu_custom_call.1} parent=35 // pred_fallthru
          _
        // Predicated region
        $region53: #{tpu_custom_call.1} parent=35 // pred_check
          %p318 = pneg %p280
        $region54: #{tpu_custom_call.1} parent=35 // pred_check_branch
          %320 = sbr.rel (%p318) target = $region56
        $region55: #{tpu_custom_call.1} parent=35 // pred_region
          %321 = vst [vmem:[#allocation2] sm:$0xff] 0.0
          %322 = vst [vmem:[#allocation2 + $0x8] sm:$0xff] 0.0
          %323 = vst [vmem:[#allocation2 + $0x10] sm:$0xff] 0.0
          %324 = vst [vmem:[#allocation2 + $0x18] sm:$0xff] 0.0
          %325 = vst [vmem:[#allocation2 + $0x20] sm:$0xff] 0.0
          %326 = vst [vmem:[#allocation2 + $0x28] sm:$0xff] 0.0
          %327 = vst [vmem:[#allocation2 + $0x30] sm:$0xff] 0.0
          %328 = vst [vmem:[#allocation2 + $0x38] sm:$0xff] 0.0
          %329 = vst [vmem:[#allocation2 + $0x40] sm:$0xff] 0.0
          %330 = vst [vmem:[#allocation2 + $0x48] sm:$0xff] 0.0
          %331 = vst [vmem:[#allocation2 + $0x50] sm:$0xff] 0.0
          %332 = vst [vmem:[#allocation2 + $0x58] sm:$0xff] 0.0
          %333 = vst [vmem:[#allocation2 + $0x60] sm:$0xff] 0.0
          %334 = vst [vmem:[#allocation2 + $0x68] sm:$0xff] 0.0
          %335 = vst [vmem:[#allocation2 + $0x70] sm:$0xff] 0.0
          %336 = vst [vmem:[#allocation2 + $0x78] sm:$0xff] 0.0
        $region56: #{tpu_custom_call.1} parent=35 // pred_fallthru
          _
        %s337 = sadd.s32 %s23, 1
        %p338 = scmp.lt.s32.totalorder %s337, 0
        %s339 = ssub.s32 0, %s337
        %s340 = scalar_select %p338, %s339, %s337
        %s341 = sand.u32 %s340, 1
        %s342 = ssub.s32 0, %s341
        %s343 = scalar_select %p338, %s342, %s341
        %p344 = scmp.ne.s32.totalorder %s343, 0
        %p345 = scmp.lt.s32.totalorder %s343, 0
        %p346 = pnand %p345, %p344
        %p347 = pneg %p346
        %s348 = sadd.s32 %s343, 2
        %s349 = scalar_select %p347, %s348, %s343
        %s350 = smul.u32 %s25, 128
        %s351 = smul.u32 %s349, 128
        %s352 = sadd.s32 %s350, %s351
        %s353 = scalar_lea.vmem [#allocation3], %s352
        %v354 = vld [vmem:[%s353] sm:$0xff]
        %v355 = vld [vmem:[%s353 + $0x8] sm:$0xff]
        %v356 = vld [vmem:[%s353 + $0x10] sm:$0xff]
        %v357 = vld [vmem:[%s353 + $0x18] sm:$0xff]
        %v358 = vld [vmem:[%s353 + $0x20] sm:$0xff]
        %v359 = vld [vmem:[%s353 + $0x28] sm:$0xff]
        %v360 = vld [vmem:[%s353 + $0x30] sm:$0xff]
        %v361 = vld [vmem:[%s353 + $0x38] sm:$0xff]
        %v362 = vld [vmem:[%s353 + $0x40] sm:$0xff]
        %v363 = vld [vmem:[%s353 + $0x48] sm:$0xff]
        %v364 = vld [vmem:[%s353 + $0x50] sm:$0xff]
        %v365 = vld [vmem:[%s353 + $0x58] sm:$0xff]
        %v366 = vld [vmem:[%s353 + $0x60] sm:$0xff]
        %v367 = vld [vmem:[%s353 + $0x68] sm:$0xff]
        %v368 = vld [vmem:[%s353 + $0x70] sm:$0xff]
        %v369 = vld [vmem:[%s353 + $0x78] sm:$0xff]
        %v370 = vld [vmem:[#allocation2] sm:$0xff]
        %v371 = vld [vmem:[#allocation2 + $0x8] sm:$0xff]
        %v372 = vld [vmem:[#allocation2 + $0x10] sm:$0xff]
        %v373 = vld [vmem:[#allocation2 + $0x18] sm:$0xff]
        %v374 = vld [vmem:[#allocation2 + $0x20] sm:$0xff]
        %v375 = vld [vmem:[#allocation2 + $0x28] sm:$0xff]
        %v376 = vld [vmem:[#allocation2 + $0x30] sm:$0xff]
        %v377 = vld [vmem:[#allocation2 + $0x38] sm:$0xff]
        %v378 = vld [vmem:[#allocation2 + $0x40] sm:$0xff]
        %v379 = vld [vmem:[#allocation2 + $0x48] sm:$0xff]
        %v380 = vld [vmem:[#allocation2 + $0x50] sm:$0xff]
        %v381 = vld [vmem:[#allocation2 + $0x58] sm:$0xff]
        %v382 = vld [vmem:[#allocation2 + $0x60] sm:$0xff]
        %v383 = vld [vmem:[#allocation2 + $0x68] sm:$0xff]
        %v384 = vld [vmem:[#allocation2 + $0x70] sm:$0xff]
        %v385 = vld [vmem:[#allocation2 + $0x78] sm:$0xff]
        %v386 = vld [vmem:[#allocation4] sm:$0xff]
        %v387 = vld [vmem:[#allocation4 + $0x8] sm:$0xff]
        %v388 = vld [vmem:[#allocation4 + $0x10] sm:$0xff]
        %v389 = vld [vmem:[#allocation4 + $0x18] sm:$0xff]
        %v390 = vld [vmem:[#allocation4 + $0x20] sm:$0xff]
        %v391 = vld [vmem:[#allocation4 + $0x28] sm:$0xff]
        %v392 = vld [vmem:[#allocation4 + $0x30] sm:$0xff]
        %v393 = vld [vmem:[#allocation4 + $0x38] sm:$0xff]
        %v394 = vld [vmem:[#allocation4 + $0x40] sm:$0xff]
        %v395 = vld [vmem:[#allocation4 + $0x48] sm:$0xff]
        %v396 = vld [vmem:[#allocation4 + $0x50] sm:$0xff]
        %v397 = vld [vmem:[#allocation4 + $0x58] sm:$0xff]
        %v398 = vld [vmem:[#allocation4 + $0x60] sm:$0xff]
        %v399 = vld [vmem:[#allocation4 + $0x68] sm:$0xff]
        %v400 = vld [vmem:[#allocation4 + $0x70] sm:$0xff]
        %v401 = vld [vmem:[#allocation4 + $0x78] sm:$0xff]
        %402 = vmatprep.subr.mxu0 0.0
        %403 = vmatpush1.msra.mxu0 %v354
        %404 = vmatprep.subr.mxu0 0.0
        %405 = vmatpush1.msra.mxu0 %v355
        %406 = vmatprep.subr.mxu0 0.0
        %407 = vmatpush1.msra.mxu0 %v356
        %408 = vmatprep.subr.mxu0 0.0
        %409 = vmatpush1.msra.mxu0 %v357
        %410 = vmatprep.subr.mxu0 0.0
        %411 = vmatpush1.msra.mxu0 %v358
        %412 = vmatprep.subr.mxu0 0.0
        %413 = vmatpush1.msra.mxu0 %v359
        %414 = vmatprep.subr.mxu0 0.0
        %415 = vmatpush1.msra.mxu0 %v360
        %416 = vmatprep.subr.mxu0 0.0
        %417 = vmatpush1.msra.mxu0 %v361
        %418 = vmatprep.subr.mxu0 0.0
        %419 = vmatpush1.msra.mxu0 %v362
        %420 = vmatprep.subr.mxu0 0.0
        %421 = vmatpush1.msra.mxu0 %v363
        %422 = vmatprep.subr.mxu0 0.0
        %423 = vmatpush1.msra.mxu0 %v364
        %424 = vmatprep.subr.mxu0 0.0
        %425 = vmatpush1.msra.mxu0 %v365
        %426 = vmatprep.subr.mxu0 0.0
        %427 = vmatpush1.msra.mxu0 %v366
        %428 = vmatprep.subr.mxu0 0.0
        %429 = vmatpush1.msra.mxu0 %v367
        %430 = vmatprep.subr.mxu0 0.0
        %431 = vmatpush1.msra.mxu0 %v368
        %432 = vmatprep.subr.mxu0 0.0
        %433 = vmatpush1.msra.mxu0 %v369
        %434 = vmatprep.subr.mxu0 0.0
        %435 = vmatpush1.msra.mxu0 0.0
        %436 = vmatprep.subr.mxu0 0.0
        %437 = vmatpush1.msra.mxu0 0.0
        %438 = vmatprep.subr.mxu0 0.0
        %439 = vmatpush1.msra.mxu0 0.0
        %440 = vmatprep.subr.mxu0 0.0
        %441 = vmatpush1.msra.mxu0 0.0
        %442 = vmatprep.subr.mxu0 0.0
        %443 = vmatpush1.msra.mxu0 0.0
        %444 = vmatprep.subr.mxu0 0.0
        %445 = vmatpush1.msra.mxu0 0.0
        %446 = vmatprep.subr.mxu0 0.0
        %447 = vmatpush1.msra.mxu0 0.0
        %448 = vmatprep.subr.mxu0 0.0
        %449 = vmatpush1.msra.mxu0 0.0
        %450 = vmatprep.subr.mxu0 0.0
        %451 = vmatpush1.msra.mxu0 0.0
        %452 = vmatprep.subr.mxu0 0.0
        %453 = vmatpush1.msra.mxu0 0.0
        %454 = vmatprep.subr.mxu0 0.0
        %455 = vmatpush1.msra.mxu0 0.0
        %456 = vmatprep.subr.mxu0 0.0
        %457 = vmatpush1.msra.mxu0 0.0
        %458 = vmatprep.subr.mxu0 0.0
        %459 = vmatpush1.msra.mxu0 0.0
        %460 = vmatprep.subr.mxu0 0.0
        %461 = vmatpush1.msra.mxu0 0.0
        %462 = vmatprep.subr.mxu0 0.0
        %463 = vmatpush1.msra.mxu0 0.0
        %464 = vmatprep.subr.mxu0 0.0
        %465 = vmatpush1.msra.mxu0 0.0
        %466 = vmatprep.mubr.f32.mxu0 0.0
        %467 = vmatmul.mubr.f32.gmra.mrb[0].mxu0 %v386
        %v468 = vpop.f32.mrb[0].mxu0
        %v469 = vadd.f32 0.0, %v468
        %v470 = vpop.f32.mrb[0].mxu0
        %471 = vmatprep.mubr.f32.mxu0 0.0
        %472 = vmatmul.mubr.f32.gmra.mrb[0].mxu0 %v387
        %v473 = vpop.f32.mrb[0].mxu0
        %v474 = vadd.f32 0.0, %v473
        %v475 = vpop.f32.mrb[0].mxu0
        %476 = vmatprep.mubr.f32.mxu0 0.0
        %477 = vmatmul.mubr.f32.gmra.mrb[0].mxu0 %v388
        %v478 = vpop.f32.mrb[0].mxu0
        %v479 = vadd.f32 0.0, %v478
        %v480 = vpop.f32.mrb[0].mxu0
        %481 = vmatprep.mubr.f32.mxu0 0.0
        %482 = vmatmul.mubr.f32.gmra.mrb[0].mxu0 %v389
        %v483 = vpop.f32.mrb[0].mxu0
        %v484 = vadd.f32 0.0, %v483
        %v485 = vpop.f32.mrb[0].mxu0
        %486 = vmatprep.mubr.f32.mxu0 0.0
        %487 = vmatmul.mubr.f32.gmra.mrb[0].mxu0 %v390
        %v488 = vpop.f32.mrb[0].mxu0
        %v489 = vadd.f32 0.0, %v488
        %v490 = vpop.f32.mrb[0].mxu0
        %491 = vmatprep.mubr.f32.mxu0 0.0
        %492 = vmatmul.mubr.f32.gmra.mrb[0].mxu0 %v391
        %v493 = vpop.f32.mrb[0].mxu0
        %v494 = vadd.f32 0.0, %v493
        %v495 = vpop.f32.mrb[0].mxu0
        %496 = vmatprep.mubr.f32.mxu0 0.0
        %497 = vmatmul.mubr.f32.gmra.mrb[0].mxu0 %v392
        %v498 = vpop.f32.mrb[0].mxu0
        %v499 = vadd.f32 0.0, %v498
        %v500 = vpop.f32.mrb[0].mxu0
        %501 = vmatprep.mubr.f32.mxu0 0.0
        %502 = vmatmul.mubr.f32.gmra.mrb[0].mxu0 %v393
        %v503 = vpop.f32.mrb[0].mxu0
        %v504 = vadd.f32 0.0, %v503
        %v505 = vpop.f32.mrb[0].mxu0
        %506 = vmatprep.mubr.f32.mxu0 0.0
        %507 = vmatmul.mubr.f32.gmra.mrb[0].mxu0 %v394
        %v508 = vpop.f32.mrb[0].mxu0
        %v509 = vadd.f32 0.0, %v508
        %v510 = vpop.f32.mrb[0].mxu0
        %511 = vmatprep.mubr.f32.mxu0 0.0
        %512 = vmatmul.mubr.f32.gmra.mrb[0].mxu0 %v395
        %v513 = vpop.f32.mrb[0].mxu0
        %v514 = vadd.f32 0.0, %v513
        %v515 = vpop.f32.mrb[0].mxu0
        %516 = vmatprep.mubr.f32.mxu0 0.0
        %517 = vmatmul.mubr.f32.gmra.mrb[0].mxu0 %v396
        %v518 = vpop.f32.mrb[0].mxu0
        %v519 = vadd.f32 0.0, %v518
        %v520 = vpop.f32.mrb[0].mxu0
        %521 = vmatprep.mubr.f32.mxu0 0.0
        %522 = vmatmul.mubr.f32.gmra.mrb[0].mxu0 %v397
        %v523 = vpop.f32.mrb[0].mxu0
        %v524 = vadd.f32 0.0, %v523
        %v525 = vpop.f32.mrb[0].mxu0
        %526 = vmatprep.mubr.f32.mxu0 0.0
        %527 = vmatmul.mubr.f32.gmra.mrb[0].mxu0 %v398
        %v528 = vpop.f32.mrb[0].mxu0
        %v529 = vadd.f32 0.0, %v528
        %v530 = vpop.f32.mrb[0].mxu0
        %531 = vmatprep.mubr.f32.mxu0 0.0
        %532 = vmatmul.mubr.f32.gmra.mrb[0].mxu0 %v399
        %v533 = vpop.f32.mrb[0].mxu0
        %v534 = vadd.f32 0.0, %v533
        %v535 = vpop.f32.mrb[0].mxu0
        %536 = vmatprep.mubr.f32.mxu0 0.0
        %537 = vmatmul.mubr.f32.gmra.mrb[0].mxu0 %v400
        %v538 = vpop.f32.mrb[0].mxu0
        %v539 = vadd.f32 0.0, %v538
        %v540 = vpop.f32.mrb[0].mxu0
        %541 = vmatprep.mubr.f32.mxu0 0.0
        %542 = vmatmul.mubr.f32.gmra.mrb[0].mxu0 %v401
        %v543 = vpop.f32.mrb[0].mxu0
        %v544 = vadd.f32 0.0, %v543
        %v545 = vpop.f32.mrb[0].mxu0
        %546 = vdwg.mxu0
        %v547 = vadd.f32 %v370, %v469
        %v548 = vadd.f32 %v371, %v474
        %v549 = vadd.f32 %v372, %v479
        %v550 = vadd.f32 %v373, %v484
        %v551 = vadd.f32 %v374, %v489
        %v552 = vadd.f32 %v375, %v494
        %v553 = vadd.f32 %v376, %v499
        %v554 = vadd.f32 %v377, %v504
        %v555 = vadd.f32 %v378, %v509
        %v556 = vadd.f32 %v379, %v514
        %v557 = vadd.f32 %v380, %v519
        %v558 = vadd.f32 %v381, %v524
        %v559 = vadd.f32 %v382, %v529
        %v560 = vadd.f32 %v383, %v534
        %v561 = vadd.f32 %v384, %v539
        %v562 = vadd.f32 %v385, %v544
        %563 = vst [vmem:[#allocation2] sm:$0xff] %v547
        %564 = vst [vmem:[#allocation2 + $0x8] sm:$0xff] %v548
        %565 = vst [vmem:[#allocation2 + $0x10] sm:$0xff] %v549
        %566 = vst [vmem:[#allocation2 + $0x18] sm:$0xff] %v550
        %567 = vst [vmem:[#allocation2 + $0x20] sm:$0xff] %v551
        %568 = vst [vmem:[#allocation2 + $0x28] sm:$0xff] %v552
        %569 = vst [vmem:[#allocation2 + $0x30] sm:$0xff] %v553
        %570 = vst [vmem:[#allocation2 + $0x38] sm:$0xff] %v554
        %571 = vst [vmem:[#allocation2 + $0x40] sm:$0xff] %v555
        %572 = vst [vmem:[#allocation2 + $0x48] sm:$0xff] %v556
        %573 = vst [vmem:[#allocation2 + $0x50] sm:$0xff] %v557
        %574 = vst [vmem:[#allocation2 + $0x58] sm:$0xff] %v558
        %575 = vst [vmem:[#allocation2 + $0x60] sm:$0xff] %v559
        %576 = vst [vmem:[#allocation2 + $0x68] sm:$0xff] %v560
        %577 = vst [vmem:[#allocation2 + $0x70] sm:$0xff] %v561
        %578 = vst [vmem:[#allocation2 + $0x78] sm:$0xff] %v562
        // Predicated region
        $region57: #{tpu_custom_call.1} parent=35 // pred_check
          %p579 = pneg %p280
        $region58: #{tpu_custom_call.1} parent=35 // pred_check_branch
          %581 = sbr.rel (%p579) target = $region60
        $region59: #{tpu_custom_call.1} parent=35 // pred_region
          %v582 = vld [vmem:[#allocation2] sm:$0xff]
          %v583 = vld [vmem:[#allocation2 + $0x8] sm:$0xff]
          %v584 = vld [vmem:[#allocation2 + $0x10] sm:$0xff]
          %v585 = vld [vmem:[#allocation2 + $0x18] sm:$0xff]
          %v586 = vld [vmem:[#allocation2 + $0x20] sm:$0xff]
          %v587 = vld [vmem:[#allocation2 + $0x28] sm:$0xff]
          %v588 = vld [vmem:[#allocation2 + $0x30] sm:$0xff]
          %v589 = vld [vmem:[#allocation2 + $0x38] sm:$0xff]
          %v590 = vld [vmem:[#allocation2 + $0x40] sm:$0xff]
          %v591 = vld [vmem:[#allocation2 + $0x48] sm:$0xff]
          %v592 = vld [vmem:[#allocation2 + $0x50] sm:$0xff]
          %v593 = vld [vmem:[#allocation2 + $0x58] sm:$0xff]
          %v594 = vld [vmem:[#allocation2 + $0x60] sm:$0xff]
          %v595 = vld [vmem:[#allocation2 + $0x68] sm:$0xff]
          %v596 = vld [vmem:[#allocation2 + $0x70] sm:$0xff]
          %v597 = vld [vmem:[#allocation2 + $0x78] sm:$0xff]
          %v598 = vld [vmem:[%s249] sm:$0xff]
          %v599 = vld [vmem:[%s249 + $0x8] sm:$0xff]
          %v600 = vld [vmem:[%s249 + $0x10] sm:$0xff]
          %v601 = vld [vmem:[%s249 + $0x18] sm:$0xff]
          %v602 = vld [vmem:[%s249 + $0x20] sm:$0xff]
          %v603 = vld [vmem:[%s249 + $0x28] sm:$0xff]
          %v604 = vld [vmem:[%s249 + $0x30] sm:$0xff]
          %v605 = vld [vmem:[%s249 + $0x38] sm:$0xff]
          %v606 = vld [vmem:[%s249 + $0x40] sm:$0xff]
          %v607 = vld [vmem:[%s249 + $0x48] sm:$0xff]
          %v608 = vld [vmem:[%s249 + $0x50] sm:$0xff]
          %v609 = vld [vmem:[%s249 + $0x58] sm:$0xff]
          %v610 = vld [vmem:[%s249 + $0x60] sm:$0xff]
          %v611 = vld [vmem:[%s249 + $0x68] sm:$0xff]
          %v612 = vld [vmem:[%s249 + $0x70] sm:$0xff]
          %v613 = vld [vmem:[%s249 + $0x78] sm:$0xff]
          %v614 = vld [vmem:[%s275] sm:$0x1]
          %v616 = vlaneseq
          %v617 = vshrl.u32 %v616, 7
          %v618 = vsub.s32 0, %v617
          %v619 = vrot.slane %v614, %v618
          %621 = vmatprep.subr.mxu0 0.0
          %622 = vmatpush1.msra.mxu0 %v598
          %623 = vmatprep.subr.mxu0 0.0
          %624 = vmatpush1.msra.mxu0 %v599
          %625 = vmatprep.subr.mxu0 0.0
          %626 = vmatpush1.msra.mxu0 %v600
          %627 = vmatprep.subr.mxu0 0.0
          %628 = vmatpush1.msra.mxu0 %v601
          %629 = vmatprep.subr.mxu0 0.0
          %630 = vmatpush1.msra.mxu0 %v602
          %631 = vmatprep.subr.mxu0 0.0
          %632 = vmatpush1.msra.mxu0 %v603
          %633 = vmatprep.subr.mxu0 0.0
          %634 = vmatpush1.msra.mxu0 %v604
          %635 = vmatprep.subr.mxu0 0.0
          %636 = vmatpush1.msra.mxu0 %v605
          %637 = vmatprep.subr.mxu0 0.0
          %638 = vmatpush1.msra.mxu0 %v606
          %639 = vmatprep.subr.mxu0 0.0
          %640 = vmatpush1.msra.mxu0 %v607
          %641 = vmatprep.subr.mxu0 0.0
          %642 = vmatpush1.msra.mxu0 %v608
          %643 = vmatprep.subr.mxu0 0.0
          %644 = vmatpush1.msra.mxu0 %v609
          %645 = vmatprep.subr.mxu0 0.0
          %646 = vmatpush1.msra.mxu0 %v610
          %647 = vmatprep.subr.mxu0 0.0
          %648 = vmatpush1.msra.mxu0 %v611
          %649 = vmatprep.subr.mxu0 0.0
          %650 = vmatpush1.msra.mxu0 %v612
          %651 = vmatprep.subr.mxu0 0.0
          %652 = vmatpush1.msra.mxu0 %v613
          %653 = vmatprep.subr.mxu0 0.0
          %654 = vmatpush1.msra.mxu0 0.0
          %655 = vmatprep.subr.mxu0 0.0
          %656 = vmatpush1.msra.mxu0 0.0
          %657 = vmatprep.subr.mxu0 0.0
          %658 = vmatpush1.msra.mxu0 0.0
          %659 = vmatprep.subr.mxu0 0.0
          %660 = vmatpush1.msra.mxu0 0.0
          %661 = vmatprep.subr.mxu0 0.0
          %662 = vmatpush1.msra.mxu0 0.0
          %663 = vmatprep.subr.mxu0 0.0
          %664 = vmatpush1.msra.mxu0 0.0
          %665 = vmatprep.subr.mxu0 0.0
          %666 = vmatpush1.msra.mxu0 0.0
          %667 = vmatprep.subr.mxu0 0.0
          %668 = vmatpush1.msra.mxu0 0.0
          %669 = vmatprep.subr.mxu0 0.0
          %670 = vmatpush1.msra.mxu0 0.0
          %671 = vmatprep.subr.mxu0 0.0
          %672 = vmatpush1.msra.mxu0 0.0
          %673 = vmatprep.subr.mxu0 0.0
          %674 = vmatpush1.msra.mxu0 0.0
          %675 = vmatprep.subr.mxu0 0.0
          %676 = vmatpush1.msra.mxu0 0.0
          %677 = vmatprep.subr.mxu0 0.0
          %678 = vmatpush1.msra.mxu0 0.0
          %679 = vmatprep.subr.mxu0 0.0
          %680 = vmatpush1.msra.mxu0 0.0
          %681 = vmatprep.subr.mxu0 0.0
          %682 = vmatpush1.msra.mxu0 0.0
          %683 = vmatprep.subr.mxu0 0.0
          %684 = vmatpush1.msra.mxu0 0.0
          %685 = vmatprep.mubr.f32.mxu0 0.0
          %686 = vmatmul.mubr.f32.gmra.mrb[0].mxu0 %v582
          %v687 = vpop.f32.mrb[0].mxu0
          %v688 = vadd.f32 %v619, %v687
          %v689 = vpop.f32.mrb[0].mxu0
          %690 = vmatprep.mubr.f32.mxu0 0.0
          %691 = vmatmul.mubr.f32.gmra.mrb[0].mxu0 %v583
          %v692 = vpop.f32.mrb[0].mxu0
          %v693 = vadd.f32 %v619, %v692
          %v694 = vpop.f32.mrb[0].mxu0
          %695 = vmatprep.mubr.f32.mxu0 0.0
          %696 = vmatmul.mubr.f32.gmra.mrb[0].mxu0 %v584
          %v697 = vpop.f32.mrb[0].mxu0
          %v698 = vadd.f32 %v619, %v697
          %v699 = vpop.f32.mrb[0].mxu0
          %700 = vmatprep.mubr.f32.mxu0 0.0
          %701 = vmatmul.mubr.f32.gmra.mrb[0].mxu0 %v585
          %v702 = vpop.f32.mrb[0].mxu0
          %v703 = vadd.f32 %v619, %v702
          %v704 = vpop.f32.mrb[0].mxu0
          %705 = vmatprep.mubr.f32.mxu0 0.0
          %706 = vmatmul.mubr.f32.gmra.mrb[0].mxu0 %v586
          %v707 = vpop.f32.mrb[0].mxu0
          %v708 = vadd.f32 %v619, %v707
          %v709 = vpop.f32.mrb[0].mxu0
          %710 = vmatprep.mubr.f32.mxu0 0.0
          %711 = vmatmul.mubr.f32.gmra.mrb[0].mxu0 %v587
          %v712 = vpop.f32.mrb[0].mxu0
          %v713 = vadd.f32 %v619, %v712
          %v714 = vpop.f32.mrb[0].mxu0
          %715 = vmatprep.mubr.f32.mxu0 0.0
          %716 = vmatmul.mubr.f32.gmra.mrb[0].mxu0 %v588
          %v717 = vpop.f32.mrb[0].mxu0
          %v718 = vadd.f32 %v619, %v717
          %v719 = vpop.f32.mrb[0].mxu0
          %720 = vmatprep.mubr.f32.mxu0 0.0
          %721 = vmatmul.mubr.f32.gmra.mrb[0].mxu0 %v589
          %v722 = vpop.f32.mrb[0].mxu0
          %v723 = vadd.f32 %v619, %v722
          %v724 = vpop.f32.mrb[0].mxu0
          %725 = vmatprep.mubr.f32.mxu0 0.0
          %726 = vmatmul.mubr.f32.gmra.mrb[0].mxu0 %v590
          %v727 = vpop.f32.mrb[0].mxu0
          %v728 = vadd.f32 %v619, %v727
          %v729 = vpop.f32.mrb[0].mxu0
          %730 = vmatprep.mubr.f32.mxu0 0.0
          %731 = vmatmul.mubr.f32.gmra.mrb[0].mxu0 %v591
          %v732 = vpop.f32.mrb[0].mxu0
          %v733 = vadd.f32 %v619, %v732
          %v734 = vpop.f32.mrb[0].mxu0
          %735 = vmatprep.mubr.f32.mxu0 0.0
          %736 = vmatmul.mubr.f32.gmra.mrb[0].mxu0 %v592
          %v737 = vpop.f32.mrb[0].mxu0
          %v738 = vadd.f32 %v619, %v737
          %v739 = vpop.f32.mrb[0].mxu0
          %740 = vmatprep.mubr.f32.mxu0 0.0
          %741 = vmatmul.mubr.f32.gmra.mrb[0].mxu0 %v593
          %v742 = vpop.f32.mrb[0].mxu0
          %v743 = vadd.f32 %v619, %v742
          %v744 = vpop.f32.mrb[0].mxu0
          %745 = vmatprep.mubr.f32.mxu0 0.0
          %746 = vmatmul.mubr.f32.gmra.mrb[0].mxu0 %v594
          %v747 = vpop.f32.mrb[0].mxu0
          %v748 = vadd.f32 %v619, %v747
          %v749 = vpop.f32.mrb[0].mxu0
          %750 = vmatprep.mubr.f32.mxu0 0.0
          %751 = vmatmul.mubr.f32.gmra.mrb[0].mxu0 %v595
          %v752 = vpop.f32.mrb[0].mxu0
          %v753 = vadd.f32 %v619, %v752
          %v754 = vpop.f32.mrb[0].mxu0
          %755 = vmatprep.mubr.f32.mxu0 0.0
          %756 = vmatmul.mubr.f32.gmra.mrb[0].mxu0 %v596
          %v757 = vpop.f32.mrb[0].mxu0
          %v758 = vadd.f32 %v619, %v757
          %v759 = vpop.f32.mrb[0].mxu0
          %760 = vmatprep.mubr.f32.mxu0 0.0
          %761 = vmatmul.mubr.f32.gmra.mrb[0].mxu0 %v597
          %v762 = vpop.f32.mrb[0].mxu0
          %v763 = vadd.f32 %v619, %v762
          %v764 = vpop.f32.mrb[0].mxu0
          %765 = vdwg.mxu0
          %s766 = smul.u32 %s24, 128
          %p767 = scmp.lt.s32.totalorder %s23, 2
          // Predicated region
          $region61: #{tpu_custom_call.1} parent=59 // pred_check
            %p768 = pneg %p767
          $region62: #{tpu_custom_call.1} parent=59 // pred_check_branch
            %770 = sbr.rel (%p768) target = $region64
          $region63: #{tpu_custom_call.1} parent=59 // pred_region
            %p771 = scmp.lt.s32.totalorder %s23, 0
            %s772 = ssub.s32 0, %s23
            %s773 = scalar_select %p771, %s772, %s23
            %s774 = sand.u32 %s773, 1
            %s775 = ssub.s32 0, %s774
            %s776 = scalar_select %p771, %s775, %s774
            %p777 = scmp.ne.s32.totalorder %s776, 0
            %p778 = scmp.lt.s32.totalorder %s776, 0
            %p779 = pnand %p778, %p777
            %p780 = pneg %p779
            %s781 = sadd.s32 %s776, 2
            %s782 = scalar_select %p780, %s781, %s776
            %v783 = vmax.f32 %v688, 0.0
            %v784 = vmax.f32 %v693, 0.0
            %v785 = vmax.f32 %v698, 0.0
            %v786 = vmax.f32 %v703, 0.0
            %v787 = vmax.f32 %v708, 0.0
            %v788 = vmax.f32 %v713, 0.0
            %v789 = vmax.f32 %v718, 0.0
            %v790 = vmax.f32 %v723, 0.0
            %v791 = vmax.f32 %v728, 0.0
            %v792 = vmax.f32 %v733, 0.0
            %v793 = vmax.f32 %v738, 0.0
            %v794 = vmax.f32 %v743, 0.0
            %v795 = vmax.f32 %v748, 0.0
            %v796 = vmax.f32 %v753, 0.0
            %v797 = vmax.f32 %v758, 0.0
            %v798 = vmax.f32 %v763, 0.0
            %s799 = smul.u32 %s782, 128
            %s800 = sadd.s32 %s766, %s799
            %s801 = scalar_lea.vmem [#allocation3], %s800
            %802 = vst [vmem:[%s801] sm:$0xff] %v783
            %803 = vst [vmem:[%s801 + $0x8] sm:$0xff] %v784
            %804 = vst [vmem:[%s801 + $0x10] sm:$0xff] %v785
            %805 = vst [vmem:[%s801 + $0x18] sm:$0xff] %v786
            %806 = vst [vmem:[%s801 + $0x20] sm:$0xff] %v787
            %807 = vst [vmem:[%s801 + $0x28] sm:$0xff] %v788
            %808 = vst [vmem:[%s801 + $0x30] sm:$0xff] %v789
            %809 = vst [vmem:[%s801 + $0x38] sm:$0xff] %v790
            %810 = vst [vmem:[%s801 + $0x40] sm:$0xff] %v791
            %811 = vst [vmem:[%s801 + $0x48] sm:$0xff] %v792
            %812 = vst [vmem:[%s801 + $0x50] sm:$0xff] %v793
            %813 = vst [vmem:[%s801 + $0x58] sm:$0xff] %v794
            %814 = vst [vmem:[%s801 + $0x60] sm:$0xff] %v795
            %815 = vst [vmem:[%s801 + $0x68] sm:$0xff] %v796
            %816 = vst [vmem:[%s801 + $0x70] sm:$0xff] %v797
            %817 = vst [vmem:[%s801 + $0x78] sm:$0xff] %v798
          $region64: #{tpu_custom_call.1} parent=59 // pred_fallthru
            _
          %p818 = scmp.eq.s32.totalorder %s23, 2
          // Predicated region
          $region65: #{tpu_custom_call.1} parent=59 // pred_check
            %p819 = pneg %p818
          $region66: #{tpu_custom_call.1} parent=59 // pred_check_branch
            %821 = sbr.rel (%p819) target = $region68
          $region67: #{tpu_custom_call.1} parent=59 // pred_region
            %s822 = scalar_lea.vmem [#allocation10], %s766
            %823 = vst [vmem:[%s822] sm:$0xff] %v688
            %824 = vst [vmem:[%s822 + $0x8] sm:$0xff] %v693
            %825 = vst [vmem:[%s822 + $0x10] sm:$0xff] %v698
            %826 = vst [vmem:[%s822 + $0x18] sm:$0xff] %v703
            %827 = vst [vmem:[%s822 + $0x20] sm:$0xff] %v708
            %828 = vst [vmem:[%s822 + $0x28] sm:$0xff] %v713
            %829 = vst [vmem:[%s822 + $0x30] sm:$0xff] %v718
            %830 = vst [vmem:[%s822 + $0x38] sm:$0xff] %v723
            %831 = vst [vmem:[%s822 + $0x40] sm:$0xff] %v728
            %832 = vst [vmem:[%s822 + $0x48] sm:$0xff] %v733
            %833 = vst [vmem:[%s822 + $0x50] sm:$0xff] %v738
            %834 = vst [vmem:[%s822 + $0x58] sm:$0xff] %v743
            %835 = vst [vmem:[%s822 + $0x60] sm:$0xff] %v748
            %836 = vst [vmem:[%s822 + $0x68] sm:$0xff] %v753
            %837 = vst [vmem:[%s822 + $0x70] sm:$0xff] %v758
            %838 = vst [vmem:[%s822 + $0x78] sm:$0xff] %v763
          $region68: #{tpu_custom_call.1} parent=59 // pred_fallthru
            _
        $region60: #{tpu_custom_call.1} parent=35 // pred_fallthru
          _
        // Predicated region
        $region69: #{tpu_custom_call.1} parent=35 // pred_check
          %p839 = pneg %p151
        $region70: #{tpu_custom_call.1} parent=35 // pred_check_branch
          %841 = sbr.rel (%p839) target = $region72
        $region71: #{tpu_custom_call.1} parent=35 // pred_region
          %s843 = ssub.s32 2048, 2048
          %844 = vsyncadd [#allocation6], %s843
          %s845 = sshll.u32 [#allocation10], 4
          %s846 = int_to_ptr.vmem [resolvable:$true] %s845
          %851 = dma.vmem_to_hbm [thread:$0]  %s846, 2048, %s4, [#allocation6], 128, 128, 8
        $region72: #{tpu_custom_call.1} parent=35 // pred_fallthru
          _
        // Predicated region
        $region73: #{tpu_custom_call.1} parent=35 // pred_check
          %p852 = pneg %p151
        $region74: #{tpu_custom_call.1} parent=35 // pred_check_branch
          %854 = sbr.rel (%p852) target = $region76
        $region75: #{tpu_custom_call.1} parent=35 // pred_region
          %855 = dma.done [#allocation6], 2048
        $region76: #{tpu_custom_call.1} parent=35 // pred_fallthru
          _
      $region36: #{tpu_custom_call.1} parent=5 // pred_fallthru
        _
      %p856 = scmp.le.s32.totalorder 2, %s13
      // Predicated region
      $region77: #{tpu_custom_call.1} parent=5 // pred_check
        %p857 = pneg %p856
      $region78: #{tpu_custom_call.1} parent=5 // pred_check_branch
        %859 = sbr.rel (%p857) target = $region80
      $region79: #{tpu_custom_call.1} parent=5 // pred_region
        %s860 = ssub.s32 %s13, 2
      $region80: #{tpu_custom_call.1} parent=5 // pred_fallthru
        _
    $region6: #{tpu_custom_call.1} parent=1 // loop_footer
      %s17 = sadd.s32 1, %s13
    $region7: #{tpu_custom_call.1} parent=1 // loop_footer_branch
      %12 = sbr.rel target = $region3
    $region8: #{tpu_custom_call.1} parent=1 // loop_exit
      _
    %861 = vsyncpa [#allocation5], 1
    %s862 = scalar_lea.sflag [#allocation5], 1
    %863 = vsyncpa %s862, 1
    %864 = vsyncpa [#allocation8], 1
    %865 = vsyncpa [#allocation6], 1
    %s866 = scalar_lea.sflag [#allocation6], 1
    %867 = vsyncpa %s866, 1

</llo_original>
